<compile_context>
chip_gen: v7x
topology: tpu7x:2x2x1
jax: 0.10.0
libtpu: 0.0.40
codegen_flags: <defaults>
</compile_context>

<pallas_src>
import functools

import jax
import jax.numpy as jnp
from jax.experimental import pallas as pl
from jax.experimental.pallas import tpu as pltpu

_MIB = 1024 * 1024


# ---------------------------------------------------------------------------
# Kernels
# ---------------------------------------------------------------------------

def se_fused_kernel(x_ref, w1t_ref, b1_ref, w2t_ref, b2_ref, o_ref, *, inv_hw):
    """Single-pass SE block: one read of x, one write of out per block.

    x_ref block: (NB, C, HW) in the input's native dtype.
    """
    x = x_ref[...]                                            # native dtype

    # AdaptiveAvgPool2d(1): f32-accumulated sum over the spatial lane axis
    # (VPU partial sums + one cross-lane reduce; no f32 copy of the block).
    pooled = jnp.sum(x, axis=-1, dtype=jnp.float32)           # (NB, C)
    m = pooled * inv_hw

    # 1x1 convs on the pooled vector == tiny matmuls + bias (f32 math).
    h = jnp.dot(m, w1t_ref[...], preferred_element_type=jnp.float32) + b1_ref[...]
    h = h * jax.nn.sigmoid(h)                                 # Swish
    g = jnp.dot(h, w2t_ref[...], preferred_element_type=jnp.float32) + b2_ref[...]

    # Gate in the native dtype: only the (NB, C) gate is cast, not the block.
    gate = jax.nn.sigmoid(g).astype(x.dtype)[:, :, None]      # (NB, C, 1)
    o_ref[...] = x * gate


def se_pool_mlp_kernel(x_ref, w1t_ref, b1_ref, w2t_ref, b2_ref, gate_ref,
                       acc_ref, *, inv_hw, hw, thw):
    """Two-pass fallback, pass A: HW-tiled pooled sum + tiny MLP -> gate.

    Grid: (batch, hw_tiles); the hw axis is a reduction ('arbitrary') axis.
    """
    t = pl.program_id(1)

    @pl.when(t == 0)
    def _init():
        acc_ref[...] = jnp.zeros_like(acc_ref)

    x = x_ref[...]                                            # (1, C, THW)
    if hw % thw != 0:
        # The trailing HW tile reads past the true spatial extent; those
        # lanes hold unspecified values, so mask them before summing.
        lane = jax.lax.broadcasted_iota(jnp.int32, x.shape, 2) + t * thw
        x = jnp.where(lane < hw, x, jnp.zeros_like(x))
    acc_ref[...] += jnp.sum(x, axis=-1, dtype=jnp.float32)    # (1, C)

    @pl.when(t == pl.num_programs(1) - 1)
    def _finalize():
        m = acc_ref[...] * inv_hw
        h = jnp.dot(m, w1t_ref[...], preferred_element_type=jnp.float32) + b1_ref[...]
        h = h * jax.nn.sigmoid(h)
        g = jnp.dot(h, w2t_ref[...], preferred_element_type=jnp.float32) + b2_ref[...]
        gate_ref[...] = jax.nn.sigmoid(g)[:, :, None]         # (1, C, 1)


def se_gate_kernel(gate_ref, x_ref, o_ref):
    """Two-pass fallback, pass B: out = x * gate, freely HW-tiled."""
    x = x_ref[...]                                            # (1, C, THW)
    o_ref[...] = x * gate_ref[...].astype(x.dtype)            # (1, C, 1) broadcast


# ---------------------------------------------------------------------------
# Wrapper / tiling logic
# ---------------------------------------------------------------------------

def _tpu_vmem_and_cores():
    """Best-effort (VMEM capacity, TensorCores-per-chip) query."""
    vmem_cap, cores = 64 * _MIB, 2                  # conservative v7x defaults
    try:
        info = pltpu.get_tpu_info()
        vmem_cap = int(info.vmem_capacity_bytes)
        cores = 2 if vmem_cap <= 64 * _MIB else 1   # v7x: 64 MiB/TC, 2 TCs
        for attr in ("num_tensorcores", "tensorcore_count", "num_cores"):
            v = getattr(info, attr, None)
            if v:
                cores = int(v)
                break
    except Exception:
        pass
    return vmem_cap, cores


def _pick_nb(n, max_nb, cores):
    """Largest divisor of n <= max_nb; on multi-TC chips prefer a step count
    divisible by the core count so all TensorCores stay busy."""
    max_nb = int(max(1, min(max_nb, n)))
    divs = [d for d in range(1, max_nb + 1) if n % d == 0]
    if cores > 1:
        good = [d for d in divs if (n // d) % cores == 0]
        if good:
            return max(good)
    return max(divs)


def _se_single_pass(x_flat, w1t, b1r, w2t, b2r, *, io_budget, vmem_cap, cores,
                    weight_bytes):
    N, C, HW = x_flat.shape
    SQ = w1t.shape[1]
    dtype = x_flat.dtype
    itemsize = jnp.dtype(dtype).itemsize
    per_elem_bytes = C * HW * itemsize

    max_nb = max(1, io_budget // (4 * per_elem_bytes))
    NB = _pick_nb(N, max_nb, cores)
    grid = (N // NB,)
    # TODO(synk): if N == 1 on a multi-TensorCore chip, add a second 'parallel'
    # axis (split HW for the gating work) so both cores are occupied.

    block_bytes = NB * per_elem_bytes
    needed = 4 * block_bytes + 4 * weight_bytes + (1 << 20)   # dbl-buffered io
    vmem_limit = int(min(max(needed * 3 // 2, 32 * _MIB), int(vmem_cap * 0.9)))
    vmem_limit = max(vmem_limit, needed)

    cost = pl.CostEstimate(
        flops=2 * N * C * HW + 4 * N * C * SQ,
        transcendentals=N * (C + SQ),
        bytes_accessed=2 * N * C * HW * itemsize + weight_bytes,
    )

    kernel = functools.partial(se_fused_kernel, inv_hw=float(1.0 / HW))

    return pl.pallas_call(
        kernel,
        out_shape=jax.ShapeDtypeStruct((N, C, HW), dtype),
        grid_spec=pltpu.PrefetchScalarGridSpec(
            num_scalar_prefetch=0,
            grid=grid,
            in_specs=[
                pl.BlockSpec((NB, C, HW), lambda n: (n, 0, 0)),   # x
                pl.BlockSpec((C, SQ),     lambda n: (0, 0)),      # w1^T
                pl.BlockSpec((1, SQ),     lambda n: (0, 0)),      # b1
                pl.BlockSpec((SQ, C),     lambda n: (0, 0)),      # w2^T
                pl.BlockSpec((1, C),      lambda n: (0, 0)),      # b2
            ],
            out_specs=pl.BlockSpec((NB, C, HW), lambda n: (n, 0, 0)),
        ),
        compiler_params=pltpu.CompilerParams(
            dimension_semantics=("parallel",),
            vmem_limit_bytes=vmem_limit,
        ),
        cost_estimate=cost,
    )(x_flat, w1t, b1r, w2t, b2r)


def _se_two_pass(x_flat, w1t, b1r, w2t, b2r, *, io_budget, vmem_cap, cores,
                 weight_bytes, force_hw_tile=None):
    del cores  # both passes already expose an N-sized 'parallel' axis
    N, C, HW = x_flat.shape
    SQ = w1t.shape[1]
    dtype = x_flat.dtype
    itemsize = jnp.dtype(dtype).itemsize

    # Spatial tile: a multiple of 128, as large as the I/O budget allows.
    hw_padded = ((HW + 127) // 128) * 128
    max_thw = max(128, (io_budget // (4 * C * itemsize)) // 128 * 128)
    THW = min(hw_padded, max_thw)
    if force_hw_tile is not None:
        THW = min(hw_padded, max(128, (int(force_hw_tile) // 128) * 128))
    n_hw = pl.cdiv(HW, THW)
    # TODO(synk): if even a (1, C, 128) tile exceeds the budget (extremely
    # large C), additionally tile the channel axis.

    vmem_limit = int(min(max(6 * C * THW * itemsize + 4 * weight_bytes + (4 << 20),
                             32 * _MIB),
                         int(vmem_cap * 0.9)))
    inv_hw = float(1.0 / HW)

    # ---- Pass A: HW-tiled pooled mean + tiny MLP -> per-(n, c) gate. ----
    pool_kernel = functools.partial(se_pool_mlp_kernel, inv_hw=inv_hw,
                                    hw=HW, thw=THW)
    gate = pl.pallas_call(
        pool_kernel,
        out_shape=jax.ShapeDtypeStruct((N, C, 1), jnp.float32),
        grid_spec=pltpu.PrefetchScalarGridSpec(
            num_scalar_prefetch=0,
            grid=(N, n_hw),
            in_specs=[
                pl.BlockSpec((1, C, THW), lambda n, t: (n, 0, t)),   # x
                pl.BlockSpec((C, SQ),     lambda n, t: (0, 0)),      # w1^T
                pl.BlockSpec((1, SQ),     lambda n, t: (0, 0)),      # b1
                pl.BlockSpec((SQ, C),     lambda n, t: (0, 0)),      # w2^T
                pl.BlockSpec((1, C),      lambda n, t: (0, 0)),      # b2
            ],
            out_specs=pl.BlockSpec((1, C, 1), lambda n, t: (n, 0, 0)),
            scratch_shapes=[pltpu.VMEM((1, C), jnp.float32)],
        ),
        compiler_params=pltpu.CompilerParams(
            dimension_semantics=("parallel", "arbitrary"),
            vmem_limit_bytes=vmem_limit,
        ),
        cost_estimate=pl.CostEstimate(
            flops=N * C * HW + 4 * N * C * SQ,
            transcendentals=N * (C + SQ),
            bytes_accessed=N * C * HW * itemsize + weight_bytes + N * C * 4,
        ),
    )(x_flat, w1t, b1r, w2t, b2r)

    # ---- Pass B: out = x * gate, freely HW-tiled streaming pass. ----
    out = pl.pallas_call(
        se_gate_kernel,
        out_shape=jax.ShapeDtypeStruct((N, C, HW), dtype),
        grid_spec=pltpu.PrefetchScalarGridSpec(
            num_scalar_prefetch=0,
            grid=(N, n_hw),
            in_specs=[
                pl.BlockSpec((1, C, 1),   lambda n, t: (n, 0, 0)),   # gate
                pl.BlockSpec((1, C, THW), lambda n, t: (n, 0, t)),   # x
            ],
            out_specs=pl.BlockSpec((1, C, THW), lambda n, t: (n, 0, t)),
        ),
        compiler_params=pltpu.CompilerParams(
            dimension_semantics=("parallel", "parallel"),
            vmem_limit_bytes=vmem_limit,
        ),
        cost_estimate=pl.CostEstimate(
            flops=N * C * HW,
            transcendentals=0,
            bytes_accessed=2 * N * C * HW * itemsize + N * C * 4,
        ),
    )(gate, x_flat)

    return out


def se_block(x_nchw, w1, b1, w2, b2, *, force_two_pass=False, force_hw_tile=None):
    """SEblock forward.  x_nchw: (N, C, H, W).
    w1: (SQ, C) conv1 1x1 weight (kernel dims squeezed), b1: (SQ,)
    w2: (C, SQ) conv2 1x1 weight (kernel dims squeezed), b2: (C,)
    """
    N, C, H, W = x_nchw.shape
    SQ = int(w1.shape[0])
    HW = H * W
    dtype = x_nchw.dtype
    itemsize = jnp.dtype(dtype).itemsize

    # No padding / slicing: the block's last dim equals the full HW extent.
    x_flat = x_nchw.reshape(N, C, HW)

    vmem_cap, cores = _tpu_vmem_and_cores()
    # 128 MiB parts (v5e/v6e) can afford larger double-buffered I/O blocks
    # than 64 MiB v7x.
    io_budget = vmem_cap // 2 if vmem_cap > 96 * _MIB else (3 * vmem_cap) // 10

    # Weights pre-transposed so the kernels do (NB,C)@(C,SQ) / (NB,SQ)@(SQ,C);
    # biases as (1, SQ)/(1, C) rows -> no transposes inside the kernels.
    w1t = jnp.asarray(w1, jnp.float32).T            # (C, SQ)
    w2t = jnp.asarray(w2, jnp.float32).T            # (SQ, C)
    b1r = jnp.asarray(b1, jnp.float32).reshape(1, SQ)
    b2r = jnp.asarray(b2, jnp.float32).reshape(1, C)
    weight_bytes = (C * SQ * 2 + SQ + C) * 4

    per_elem_bytes = C * HW * itemsize
    single_pass_ok = 4 * per_elem_bytes <= io_budget     # dbl-buffered in+out @ NB=1

    if single_pass_ok and not force_two_pass:
        out = _se_single_pass(x_flat, w1t, b1r, w2t, b2r,
                              io_budget=io_budget, vmem_cap=vmem_cap,
                              cores=cores, weight_bytes=weight_bytes)
    else:
        out = _se_two_pass(x_flat, w1t, b1r, w2t, b2r,
                           io_budget=io_budget, vmem_cap=vmem_cap,
                           cores=cores, weight_bytes=weight_bytes,
                           force_hw_tile=force_hw_tile)

    return out.reshape(N, C, H, W)


# ---------------------------------------------------------------------------
# Params / reference / test
# ---------------------------------------------------------------------------

def init_params(key, ch_in, ch_sq):
    """Deterministic synthetic init mirroring kaiming_normal_ for the convs
    (conv biases keep PyTorch's default uniform init scale)."""
    k1, k2, k3, k4 = jax.random.split(key, 4)
    w1 = jax.random.normal(k1, (ch_sq, ch_in), jnp.float32) * jnp.sqrt(2.0 / ch_in)
    b1 = jax.random.uniform(k2, (ch_sq,), jnp.float32,
                            -1.0 / jnp.sqrt(ch_in), 1.0 / jnp.sqrt(ch_in))
    w2 = jax.random.normal(k3, (ch_in, ch_sq), jnp.float32) * jnp.sqrt(2.0 / ch_sq)
    b2 = jax.random.uniform(k4, (ch_in,), jnp.float32,
                            -1.0 / jnp.sqrt(ch_sq), 1.0 / jnp.sqrt(ch_sq))
    return w1, b1, w2, b2


def se_block_ref(x, w1, b1, w2, b2):
    """Pure-JAX reference for correctness check."""
    m = jnp.mean(x, axis=(2, 3))                       # (N, C)
    h = m @ w1.T + b1                                  # (N, SQ)
    h = h * jax.nn.sigmoid(h)
    g = h @ w2.T + b2                                  # (N, C)
    return x * jax.nn.sigmoid(g)[:, :, None, None]


if __name__ == "__main__":
    N, C, H, W = 2, 8, 16, 16
    SQ = 4

    key = jax.random.PRNGKey(0)
    kx, kp, kx2 = jax.random.split(key, 3)
    x = jax.random.normal(kx, (N, C, H, W), jnp.float32)
    w1, b1, w2, b2 = init_params(kp, C, SQ)

    # Main (single-pass, fused) path.
    out = jax.block_until_ready(se_block(x, w1, b1, w2, b2))
    ref = se_block_ref(x, w1, b1, w2, b2)
    assert out.shape == (N, C, H, W)
    assert jnp.allclose(out, ref, atol=1e-5, rtol=1e-5)

    # Exercise the two-pass (v7x / large-slab) fallback, including the masked
    # partial HW tile, on a spatial extent that is not a multiple of 128.
    x2 = jax.random.normal(kx2, (N, C, 15, 15), jnp.float32)
    out2 = jax.block_until_ready(
        se_block(x2, w1, b1, w2, b2, force_two_pass=True, force_hw_tile=128))
    ref2 = se_block_ref(x2, w1, b1, w2, b2)
    assert out2.shape == x2.shape
    assert jnp.allclose(out2, ref2, atol=1e-5, rtol=1e-5)

    print("KERNEL_OK")
</pallas_src>

<mosaic_0001>
module attributes {stable_mosaic.version = 11 : i64} {
  func.func @se_fused_kernel(%arg0: i32, %arg1: memref<1x8x256xf32, #tpu.memory_space<vmem>>, %arg2: memref<8x4xf32, #tpu.memory_space<vmem>>, %arg3: memref<1x4xf32, #tpu.memory_space<vmem>>, %arg4: memref<4x8xf32, #tpu.memory_space<vmem>>, %arg5: memref<1x8xf32, #tpu.memory_space<vmem>>, %arg6: memref<1x8x256xf32, #tpu.memory_space<vmem>>) attributes {dimension_semantics = [#tpu.dimension_semantics<parallel>], iteration_bounds = array<i64: 2>, scalar_prefetch = 0 : i64, scratch_operands = 0 : i64, tpu.core_type = #tpu.core_type<tc>, window_params = [{transform_indices = @transform_0, window_bounds = array<i64: 1, 8, 256>}, {pipeline_mode = #tpu.pipeline_mode<synchronous>, transform_indices = @transform_1, window_bounds = array<i64: 8, 4>}, {pipeline_mode = #tpu.pipeline_mode<synchronous>, transform_indices = @transform_2, window_bounds = array<i64: 1, 4>}, {pipeline_mode = #tpu.pipeline_mode<synchronous>, transform_indices = @transform_3, window_bounds = array<i64: 4, 8>}, {pipeline_mode = #tpu.pipeline_mode<synchronous>, transform_indices = @transform_4, window_bounds = array<i64: 1, 8>}, {transform_indices = @transform_5, window_bounds = array<i64: 1, 8, 256>}]} {
    %c0 = arith.constant 0 : index
    %c0_0 = arith.constant 0 : index
    %c0_1 = arith.constant 0 : index
    %0 = vector.load %arg1[%c0, %c0_0, %c0_1] : memref<1x8x256xf32, #tpu.memory_space<vmem>>, vector<1x8x256xf32>
    %cst = arith.constant dense<0.000000e+00> : vector<1x8xf32>
    %1 = vector.multi_reduction <add>, %0, %cst [2] : vector<1x8x256xf32> to vector<1x8xf32>
    %cst_2 = arith.constant 3.906250e-03 : f32
    %2 = vector.broadcast %cst_2 : f32 to vector<1x8xf32>
    %3 = arith.mulf %1, %2 : vector<1x8xf32>
    %c0_3 = arith.constant 0 : index
    %c0_4 = arith.constant 0 : index
    %4 = vector.load %arg2[%c0_3, %c0_4] : memref<8x4xf32, #tpu.memory_space<vmem>>, vector<8x4xf32>
    %cst_5 = arith.constant dense<0.000000e+00> : vector<1x4xf32>
    %5 = tpu.matmul %3, %4, %cst_5 {dimension_numbers = #tpu.dot_dimension_numbers<[1], [0], [0], [1], [0, 0, 1, 1], [], []>} : vector<1x8xf32>, vector<8x4xf32>, vector<1x4xf32> -> vector<1x4xf32>
    %c0_6 = arith.constant 0 : index
    %c0_7 = arith.constant 0 : index
    %6 = vector.load %arg3[%c0_6, %c0_7] : memref<1x4xf32, #tpu.memory_space<vmem>>, vector<1x4xf32>
    %7 = arith.addf %5, %6 : vector<1x4xf32>
    %8 = arith.negf %7 : vector<1x4xf32>
    %9 = math.exp %8 : vector<1x4xf32>
    %cst_8 = arith.constant 1.000000e+00 : f32
    %10 = vector.broadcast %cst_8 : f32 to vector<1x4xf32>
    %11 = arith.addf %10, %9 : vector<1x4xf32>
    %12 = arith.divf %10, %11 : vector<1x4xf32>
    %13 = arith.mulf %7, %12 : vector<1x4xf32>
    %c0_9 = arith.constant 0 : index
    %c0_10 = arith.constant 0 : index
    %14 = vector.load %arg4[%c0_9, %c0_10] : memref<4x8xf32, #tpu.memory_space<vmem>>, vector<4x8xf32>
    %cst_11 = arith.constant dense<0.000000e+00> : vector<1x8xf32>
    %15 = tpu.matmul %13, %14, %cst_11 {dimension_numbers = #tpu.dot_dimension_numbers<[1], [0], [0], [1], [0, 0, 1, 1], [], []>} : vector<1x4xf32>, vector<4x8xf32>, vector<1x8xf32> -> vector<1x8xf32>
    %c0_12 = arith.constant 0 : index
    %c0_13 = arith.constant 0 : index
    %16 = vector.load %arg5[%c0_12, %c0_13] : memref<1x8xf32, #tpu.memory_space<vmem>>, vector<1x8xf32>
    %17 = arith.addf %15, %16 : vector<1x8xf32>
    %18 = arith.negf %17 : vector<1x8xf32>
    %19 = math.exp %18 : vector<1x8xf32>
    %cst_14 = arith.constant 1.000000e+00 : f32
    %20 = vector.broadcast %cst_14 : f32 to vector<1x8xf32>
    %21 = arith.addf %20, %19 : vector<1x8xf32>
    %22 = arith.divf %20, %21 : vector<1x8xf32>
    %23 = vector.shape_cast %22 : vector<1x8xf32> to vector<1x8x1xf32>
    %24 = vector.broadcast %23 : vector<1x8x1xf32> to vector<1x8x256xf32>
    %25 = arith.mulf %0, %24 : vector<1x8x256xf32>
    %c0_15 = arith.constant 0 : index
    %c0_16 = arith.constant 0 : index
    %c0_17 = arith.constant 0 : index
    %26 = vector.load %arg6[%c0_15, %c0_16, %c0_17] : memref<1x8x256xf32, #tpu.memory_space<vmem>>, vector<1x8x256xf32>
    tpu.vector_store %arg6[%c0_15, %c0_16, %c0_17], %25 {strides = array<i32>} : memref<1x8x256xf32, #tpu.memory_space<vmem>>, vector<1x8x256xf32>,
    return
  }
  func.func @transform_0(%arg0: i32) -> (i32, i32, i32) {
    %c0_i32 = arith.constant 0 : i32
    %c0_i32_0 = arith.constant 0 : i32
    %c0_i32_1 = arith.constant 0 : i32
    return %arg0, %c0_i32, %c0_i32_0 : i32, i32, i32
  }
  func.func @transform_1(%arg0: i32) -> (i32, i32) {
    %c0_i32 = arith.constant 0 : i32
    %c0_i32_0 = arith.constant 0 : i32
    %c0_i32_1 = arith.constant 0 : i32
    return %c0_i32, %c0_i32_0 : i32, i32
  }
  func.func @transform_2(%arg0: i32) -> (i32, i32) {
    %c0_i32 = arith.constant 0 : i32
    %c0_i32_0 = arith.constant 0 : i32
    %c0_i32_1 = arith.constant 0 : i32
    return %c0_i32, %c0_i32_0 : i32, i32
  }
  func.func @transform_3(%arg0: i32) -> (i32, i32) {
    %c0_i32 = arith.constant 0 : i32
    %c0_i32_0 = arith.constant 0 : i32
    %c0_i32_1 = arith.constant 0 : i32
    return %c0_i32, %c0_i32_0 : i32, i32
  }
  func.func @transform_4(%arg0: i32) -> (i32, i32) {
    %c0_i32 = arith.constant 0 : i32
    %c0_i32_0 = arith.constant 0 : i32
    %c0_i32_1 = arith.constant 0 : i32
    return %c0_i32, %c0_i32_0 : i32, i32
  }
  func.func @transform_5(%arg0: i32) -> (i32, i32, i32) {
    %c0_i32 = arith.constant 0 : i32
    %c0_i32_0 = arith.constant 0 : i32
    %c0_i32_1 = arith.constant 0 : i32
    return %arg0, %c0_i32, %c0_i32_0 : i32, i32, i32
  }
}

</mosaic_0001>

<llo_original>
// kernel: tpu_custom_call.1
$region0: #{tpu_custom_call.1}
  #allocation0 [shape = 'u32[]', space=smem, size = 0x4, offset = 0x4, fixed_abs, tag = 'smem constant byte address 0x4 - core index']
  #allocation1 [shape = 'u32[144,128]{1,0:T(1,128)}', space=vmem, size = 0x12000, scoped, tag = 'internal scratch']
  %s0 = inlined_call_operand.hbm [shape: f32[2,8,256], index: 0, kind: input, shape index: {}]
  %s1 = inlined_call_operand.vmem [shape: f32[8,4], index: 1, kind: input, shape index: {}]
  %s2 = inlined_call_operand.vmem [shape: f32[1,4], index: 2, kind: input, shape index: {}]
  %s3 = inlined_call_operand.vmem [shape: f32[4,8], index: 3, kind: input, shape index: {}]
  %s4 = inlined_call_operand.vmem [shape: f32[1,8], index: 4, kind: input, shape index: {}]
  %s5 = inlined_call_operand.hbm [shape: f32[2,8,256], index: 5, kind: output, shape index: {}]
  %s6 = sld [smem:[#allocation0]]
  $region57: #{tpu_custom_call.1} parent=0
    _
  %s8 = ssub.s32 1, %s6
  %s9 = scalar_select 0, %s8, %s6
  $region1: #{tpu_custom_call.1} parent=0
    #allocation2 [shape = 'u8[16384]{0}', space=vmem, size = 0x4000, scoped, tag = 'input window, operand 0']
    #allocation3 [shape = 's32[2]{0}', space=sflag, size = 0x8, scoped, tag = 'scoped memory for tpu_custom_call.1']
    #allocation4 [shape = 's32[2]{0}', space=sflag, size = 0x8, scoped, tag = 'scoped memory for tpu_custom_call.1']
    #allocation5 [shape = 'u8[16384]{0}', space=vmem, size = 0x4000, scoped, tag = 'output window, operand 0']
    %10 = vsyncpa [#allocation3], 0
    %s11 = scalar_lea.sflag [#allocation3], 1
    %12 = vsyncpa %s11, 0
    %13 = vsyncpa [#allocation4], 0
    %s14 = scalar_lea.sflag [#allocation4], 1
    %15 = vsyncpa %s14, 0
    loop: start=0, step=1, limit=4
    $region2: #{tpu_custom_call.1} parent=1 // loop_pre_header
      _
    $region3: #{tpu_custom_call.1} parent=1 // loop_header
      %s17 = sphi 0, %s21
      %p18 = scmp.ge.s32.totalorder %s17, 4
      %s27 = sphi 0, %s29
      %s30 = sphi 0, %s27
      %s31 = sphi 0, %s30
      %s47 = sphi 0, %s31
      %s51 = sphi 0, %s51
      %s53 = sphi 0, %s51
      %s54 = sphi 0, %s53
      %s68 = sphi 0, %s54
      %s72 = sphi 0, %s72
      %s74 = sphi 0, %s72
      %s75 = sphi 0, %s74
      %s89 = sphi 0, %s75
      %s93 = sphi 0, %s93
      %s95 = sphi 0, %s93
      %s96 = sphi 0, %s95
      %s110 = sphi 0, %s96
      %s114 = sphi 0, %s114
      %s116 = sphi 0, %s114
      %s117 = sphi 0, %s116
      %s131 = sphi 0, %s117
      %s137 = sphi 0, %s139
      %s140 = sphi 0, %s137
      %s141 = sphi 0, %s140
      %s157 = sphi 0, %s141
    $region4: #{tpu_custom_call.1} parent=1 // loop_header_branch
      %20 = sbr.rel (%p18) target = $region8
    $region5: #{tpu_custom_call.1} parent=1 // loop_body
      %s22 = ssub.s32 %s17, 1
      %s23 = ssub.s32 %s17, 2
      %s24 = sadd.s32 %s17, 1
      %s25 = ssub.s32 %s17, %s24
      %p26 = scmp.eq.s32.totalorder %s25, 0
      %s28 = sadd.s32 %s27, 1
      %s29 = scalar_select %p26, %s27, %s28
      %p32 = pneg %p26
      %p33 = scmp.eq.s32.totalorder %s17, 1
      %p34 = por %p32, %p33
      %p35 = scmp.ne.s32.totalorder %s27, %s30
      %p36 = scmp.eq.s32.totalorder %s17, 0
      %p37 = por %p35, %p36
      %p38 = scmp.ne.s32.totalorder %s27, %s30
      %p39 = scmp.eq.s32.totalorder %s22, 1
      %p40 = por %p38, %p39
      %p41 = scmp.ne.s32.totalorder %s30, %s31
      %p42 = scmp.eq.s32.totalorder %s22, 0
      %p43 = por %p41, %p42
      %p44 = scmp.ne.s32.totalorder %s30, %s31
      %p45 = scmp.eq.s32.totalorder %s23, 1
      %p46 = por %p44, %p45
      %p48 = scmp.ne.s32.totalorder %s31, %s47
      %p49 = scmp.eq.s32.totalorder %s23, 0
      %p50 = por %p48, %p49
      %s52 = sadd.s32 %s51, 1
      %p55 = scmp.eq.s32.totalorder %s17, 1
      %p56 = scmp.ne.s32.totalorder %s51, %s53
      %p57 = scmp.eq.s32.totalorder %s17, 0
      %p58 = por %p56, %p57
      %p59 = scmp.ne.s32.totalorder %s51, %s53
      %p60 = scmp.eq.s32.totalorder %s22, 1
      %p61 = por %p59, %p60
      %p62 = scmp.ne.s32.totalorder %s53, %s54
      %p63 = scmp.eq.s32.totalorder %s22, 0
      %p64 = por %p62, %p63
      %p65 = scmp.ne.s32.totalorder %s53, %s54
      %p66 = scmp.eq.s32.totalorder %s23, 1
      %p67 = por %p65, %p66
      %p69 = scmp.ne.s32.totalorder %s54, %s68
      %p70 = scmp.eq.s32.totalorder %s23, 0
      %p71 = por %p69, %p70
      %s73 = sadd.s32 %s72, 1
      %p76 = scmp.eq.s32.totalorder %s17, 1
      %p77 = scmp.ne.s32.totalorder %s72, %s74
      %p78 = scmp.eq.s32.totalorder %s17, 0
      %p79 = por %p77, %p78
      %p80 = scmp.ne.s32.totalorder %s72, %s74
      %p81 = scmp.eq.s32.totalorder %s22, 1
      %p82 = por %p80, %p81
      %p83 = scmp.ne.s32.totalorder %s74, %s75
      %p84 = scmp.eq.s32.totalorder %s22, 0
      %p85 = por %p83, %p84
      %p86 = scmp.ne.s32.totalorder %s74, %s75
      %p87 = scmp.eq.s32.totalorder %s23, 1
      %p88 = por %p86, %p87
      %p90 = scmp.ne.s32.totalorder %s75, %s89
      %p91 = scmp.eq.s32.totalorder %s23, 0
      %p92 = por %p90, %p91
      %s94 = sadd.s32 %s93, 1
      %p97 = scmp.eq.s32.totalorder %s17, 1
      %p98 = scmp.ne.s32.totalorder %s93, %s95
      %p99 = scmp.eq.s32.totalorder %s17, 0
      %p100 = por %p98, %p99
      %p101 = scmp.ne.s32.totalorder %s93, %s95
      %p102 = scmp.eq.s32.totalorder %s22, 1
      %p103 = por %p101, %p102
      %p104 = scmp.ne.s32.totalorder %s95, %s96
      %p105 = scmp.eq.s32.totalorder %s22, 0
      %p106 = por %p104, %p105
      %p107 = scmp.ne.s32.totalorder %s95, %s96
      %p108 = scmp.eq.s32.totalorder %s23, 1
      %p109 = por %p107, %p108
      %p111 = scmp.ne.s32.totalorder %s96, %s110
      %p112 = scmp.eq.s32.totalorder %s23, 0
      %p113 = por %p111, %p112
      %s115 = sadd.s32 %s114, 1
      %p118 = scmp.eq.s32.totalorder %s17, 1
      %p119 = scmp.ne.s32.totalorder %s114, %s116
      %p120 = scmp.eq.s32.totalorder %s17, 0
      %p121 = por %p119, %p120
      %p122 = scmp.ne.s32.totalorder %s114, %s116
      %p123 = scmp.eq.s32.totalorder %s22, 1
      %p124 = por %p122, %p123
      %p125 = scmp.ne.s32.totalorder %s116, %s117
      %p126 = scmp.eq.s32.totalorder %s22, 0
      %p127 = por %p125, %p126
      %p128 = scmp.ne.s32.totalorder %s116, %s117
      %p129 = scmp.eq.s32.totalorder %s23, 1
      %p130 = por %p128, %p129
      %p132 = scmp.ne.s32.totalorder %s117, %s131
      %p133 = scmp.eq.s32.totalorder %s23, 0
      %p134 = por %p132, %p133
      %s135 = ssub.s32 %s17, %s24
      %p136 = scmp.eq.s32.totalorder %s135, 0
      %s138 = sadd.s32 %s137, 1
      %s139 = scalar_select %p136, %s137, %s138
      %p142 = pneg %p136
      %p143 = scmp.eq.s32.totalorder %s17, 1
      %p144 = por %p142, %p143
      %p145 = scmp.ne.s32.totalorder %s137, %s140
      %p146 = scmp.eq.s32.totalorder %s17, 0
      %p147 = por %p145, %p146
      %p148 = scmp.ne.s32.totalorder %s137, %s140
      %p149 = scmp.eq.s32.totalorder %s22, 1
      %p150 = por %p148, %p149
      %p151 = scmp.ne.s32.totalorder %s140, %s141
      %p152 = scmp.eq.s32.totalorder %s22, 0
      %p153 = por %p151, %p152
      %p154 = scmp.ne.s32.totalorder %s140, %s141
      %p155 = scmp.eq.s32.totalorder %s23, 1
      %p156 = por %p154, %p155
      %p158 = scmp.ne.s32.totalorder %s141, %s157
      %p159 = scmp.eq.s32.totalorder %s23, 0
      %p160 = por %p158, %p159
      %p161 = scmp.le.s32.totalorder 1, %s17
      %p162 = scmp.lt.s32.totalorder %s17, 3
      %p163 = pnand %p161, %p162
      %p164 = pneg %p163
      // Predicated region
      $region9: #{tpu_custom_call.1} parent=5 // pred_check
        _
      $region10: #{tpu_custom_call.1} parent=5 // pred_check_branch
        %166 = sbr.rel (%p163) target = $region12
      $region11: #{tpu_custom_call.1} parent=5 // pred_region
        %s167 = ssub.s32 %s17, 1
        // Predicated region
        $region13: #{tpu_custom_call.1} parent=11 // pred_check
          %p168 = pneg %p64
        $region14: #{tpu_custom_call.1} parent=11 // pred_check_branch
          %170 = sbr.rel (%p168) target = $region16
        $region15: #{tpu_custom_call.1} parent=11 // pred_region
          _
        $region16: #{tpu_custom_call.1} parent=11 // pred_fallthru
          _
        // Predicated region
        $region17: #{tpu_custom_call.1} parent=11 // pred_check
          %p171 = pneg %p85
        $region18: #{tpu_custom_call.1} parent=11 // pred_check_branch
          %173 = sbr.rel (%p171) target = $region20
        $region19: #{tpu_custom_call.1} parent=11 // pred_region
          _
        $region20: #{tpu_custom_call.1} parent=11 // pred_fallthru
          _
        // Predicated region
        $region21: #{tpu_custom_call.1} parent=11 // pred_check
          %p174 = pneg %p106
        $region22: #{tpu_custom_call.1} parent=11 // pred_check_branch
          %176 = sbr.rel (%p174) target = $region24
        $region23: #{tpu_custom_call.1} parent=11 // pred_region
          _
        $region24: #{tpu_custom_call.1} parent=11 // pred_fallthru
          _
        // Predicated region
        $region25: #{tpu_custom_call.1} parent=11 // pred_check
          %p177 = pneg %p127
        $region26: #{tpu_custom_call.1} parent=11 // pred_check_branch
          %179 = sbr.rel (%p177) target = $region28
        $region27: #{tpu_custom_call.1} parent=11 // pred_region
          _
        $region28: #{tpu_custom_call.1} parent=11 // pred_fallthru
          _
      $region12: #{tpu_custom_call.1} parent=5 // pred_fallthru
        _
      %p180 = scmp.lt.s32.totalorder %s17, 2
      // Predicated region
      $region29: #{tpu_custom_call.1} parent=5 // pred_check
        %p181 = pneg %p180
      $region30: #{tpu_custom_call.1} parent=5 // pred_check_branch
        %183 = sbr.rel (%p181) target = $region32
      $region31: #{tpu_custom_call.1} parent=5 // pred_region
        // Predicated region
        $region33: #{tpu_custom_call.1} parent=31 // pred_check
          %p184 = pneg %p37
        $region34: #{tpu_custom_call.1} parent=31 // pred_check_branch
          %186 = sbr.rel (%p184) target = $region36
        $region35: #{tpu_custom_call.1} parent=31 // pred_region
          %s187 = sand.u32 %s27, 1
          %s188 = scalar_lea.sflag [#allocation3], %s187
          %s189 = sand.u32 %s27, 1
          %s190 = smul.addr %s189, 16
          %s191 = scalar_lea.vmem [#allocation2], %s190
          %s193 = ssub.s32 256, 256
          %194 = vsyncadd %s188, %s193
          %s195 = smul.addr %s17, 2
          %s196 = smul.addr %s195, 128
          %s197 = scalar_lea.hbm %s0, %s196
          %s199 = sshll.u32 %s191, 4
          %s200 = int_to_ptr.vmem [resolvable:$true] %s199
          %202 = dma.hbm_to_vmem [thread:$0]  %s197, 256, %s200, %s188
        $region36: #{tpu_custom_call.1} parent=31 // pred_fallthru
          _
      $region32: #{tpu_custom_call.1} parent=5 // pred_fallthru
        _
      %p203 = scmp.le.s32.totalorder 1, %s17
      %p204 = scmp.lt.s32.totalorder %s17, 3
      %p205 = pnand %p203, %p204
      %p206 = pneg %p205
      // Predicated region
      $region37: #{tpu_custom_call.1} parent=5 // pred_check
        _
      $region38: #{tpu_custom_call.1} parent=5 // pred_check_branch
        %208 = sbr.rel (%p205) target = $region40
      $region39: #{tpu_custom_call.1} parent=5 // pred_region
        %s209 = ssub.s32 %s17, 1
        %s210 = sand.u32 %s30, 1
        %s211 = scalar_lea.sflag [#allocation3], %s210
        %s212 = sand.u32 %s30, 1
        %s213 = smul.addr %s212, 16
        %s214 = scalar_lea.vmem [#allocation2], %s213
        // Predicated region
        $region41: #{tpu_custom_call.1} parent=39 // pred_check
          %p215 = pneg %p43
        $region42: #{tpu_custom_call.1} parent=39 // pred_check_branch
          %217 = sbr.rel (%p215) target = $region44
        $region43: #{tpu_custom_call.1} parent=39 // pred_region
          %218 = dma.done %s211, 256
        $region44: #{tpu_custom_call.1} parent=39 // pred_fallthru
          _
        %s219 = sand.u32 %s30, 1
        %s220 = scalar_lea.sflag [#allocation3], %s219
        %s221 = sand.u32 %s30, 1
        %s222 = smul.addr %s221, 16
        %s223 = scalar_lea.vmem [#allocation2], %s222
        %p224 = pneg %p43
        %p225 = pneg %p40
        %p226 = pneg %p64
        %p227 = pneg %p61
        %p228 = pneg %p85
        %p229 = pneg %p82
        %p230 = pneg %p106
        %p231 = pneg %p103
        %p232 = pneg %p127
        %p233 = pneg %p124
        %p234 = pneg %p153
        %p235 = pneg %p150
        %s236 = sand.u32 %s140, 1
        %s237 = scalar_lea.sflag [#allocation4], %s236
        %s238 = sand.u32 %s140, 1
        %s239 = smul.addr %s238, 16
        %s240 = scalar_lea.vmem [#allocation5], %s239
        %v241 = vld [vmem:[%s214] sm:$0xff]
        %v242 = vld [vmem:[%s214 + $0x8] sm:$0xff]
        %v243 = vadd.f32 %v241, %v242
        %244 = vadd.xlane.f32.xlu0 %v243
        %v245 = vpop.xlane.xlu0 %244
        %v246 = vmul.f32 %v245, 0.00390625
        %v247 = vld [vmem:[%s1] sm:$0xff]
        %v248 = vld [vmem:[%s2] sm:$0x1]
        %v250 = vlaneseq
        %v251 = vand.u32 %v250, 127
        %v252 = vlaneseq
        %v253 = vshrl.u32 %v252, 7
        %v254 = vsub.s32 %v251, %v253
        %v255 = vrot.slane %v246, %v254
        %vm256 = vcmask 64512
        %v257 = vsel %vm256, %v255, 0
        %259 = vmatprep.subr.mxu0 0.0
        %260 = vmatpush1.msra.mxu0 %v247
        %261 = vmatprep.subr.mxu0 0.0
        %262 = vmatpush1.msra.mxu0 0.0
        %263 = vmatprep.subr.mxu0 0.0
        %264 = vmatpush1.msra.mxu0 0.0
        %265 = vmatprep.subr.mxu0 0.0
        %266 = vmatpush1.msra.mxu0 0.0
        %267 = vmatprep.subr.mxu0 0.0
        %268 = vmatpush1.msra.mxu0 0.0
        %269 = vmatprep.subr.mxu0 0.0
        %270 = vmatpush1.msra.mxu0 0.0
        %271 = vmatprep.subr.mxu0 0.0
        %272 = vmatpush1.msra.mxu0 0.0
        %273 = vmatprep.subr.mxu0 0.0
        %274 = vmatpush1.msra.mxu0 0.0
        %275 = vmatprep.subr.mxu0 0.0
        %276 = vmatpush1.msra.mxu0 0.0
        %277 = vmatprep.subr.mxu0 0.0
        %278 = vmatpush1.msra.mxu0 0.0
        %279 = vmatprep.subr.mxu0 0.0
        %280 = vmatpush1.msra.mxu0 0.0
        %281 = vmatprep.subr.mxu0 0.0
        %282 = vmatpush1.msra.mxu0 0.0
        %283 = vmatprep.subr.mxu0 0.0
        %284 = vmatpush1.msra.mxu0 0.0
        %285 = vmatprep.subr.mxu0 0.0
        %286 = vmatpush1.msra.mxu0 0.0
        %287 = vmatprep.subr.mxu0 0.0
        %288 = vmatpush1.msra.mxu0 0.0
        %289 = vmatprep.subr.mxu0 0.0
        %290 = vmatpush1.msra.mxu0 0.0
        %291 = vmatprep.subr.mxu0 0.0
        %292 = vmatpush1.msra.mxu0 0.0
        %293 = vmatprep.subr.mxu0 0.0
        %294 = vmatpush1.msra.mxu0 0.0
        %295 = vmatprep.subr.mxu0 0.0
        %296 = vmatpush1.msra.mxu0 0.0
        %297 = vmatprep.subr.mxu0 0.0
        %298 = vmatpush1.msra.mxu0 0.0
        %299 = vmatprep.subr.mxu0 0.0
        %300 = vmatpush1.msra.mxu0 0.0
        %301 = vmatprep.subr.mxu0 0.0
        %302 = vmatpush1.msra.mxu0 0.0
        %303 = vmatprep.subr.mxu0 0.0
        %304 = vmatpush1.msra.mxu0 0.0
        %305 = vmatprep.subr.mxu0 0.0
        %306 = vmatpush1.msra.mxu0 0.0
        %307 = vmatprep.subr.mxu0 0.0
        %308 = vmatpush1.msra.mxu0 0.0
        %309 = vmatprep.subr.mxu0 0.0
        %310 = vmatpush1.msra.mxu0 0.0
        %311 = vmatprep.subr.mxu0 0.0
        %312 = vmatpush1.msra.mxu0 0.0
        %313 = vmatprep.subr.mxu0 0.0
        %314 = vmatpush1.msra.mxu0 0.0
        %315 = vmatprep.subr.mxu0 0.0
        %316 = vmatpush1.msra.mxu0 0.0
        %317 = vmatprep.subr.mxu0 0.0
        %318 = vmatpush1.msra.mxu0 0.0
        %319 = vmatprep.subr.mxu0 0.0
        %320 = vmatpush1.msra.mxu0 0.0
        %321 = vmatprep.subr.mxu0 0.0
        %322 = vmatpush1.msra.mxu0 0.0
        %323 = vmatprep.mubr.f32.mxu0 0.0
        %324 = vmatmul.mubr.f32.gmra.mrb[0].mxu0 %v257
        %v325 = vpop.f32.mrb[0].mxu0
        %v326 = vadd.f32 %v248, %v325
        %v327 = vpop.f32.mrb[0].mxu0
        %328 = vdwg.mxu0
        %v329 = vxor.u32 %v326, 2147483648
        %v330 = vmul.f32 %v329, 1.442695
        %v331 = vpow.pop %v330
        %v332 = vadd.f32 %v331, 1.0
        %v333 = vrcp.pop %v332
        %v334 = vmul.f32 1.0, %v333
        %v335 = vmul.f32 %v326, %v334
        %v336 = vld [vmem:[%s3] sm:$0xf]
        %v337 = vld [vmem:[%s4] sm:$0x1]
        %vm338 = vcmask 31744
        %v340 = vsel %vm338, %v335, 0
        %vm342 = vcmask 1043456
        %v344 = vsel %vm342, %v336, 0
        %346 = vmatprep.subr.mxu0 0.0
        %347 = vmatpush1.msra.mxu0 %v344
        %348 = vmatprep.subr.mxu0 0.0
        %349 = vmatpush1.msra.mxu0 0.0
        %350 = vmatprep.subr.mxu0 0.0
        %351 = vmatpush1.msra.mxu0 0.0
        %352 = vmatprep.subr.mxu0 0.0
        %353 = vmatpush1.msra.mxu0 0.0
        %354 = vmatprep.subr.mxu0 0.0
        %355 = vmatpush1.msra.mxu0 0.0
        %356 = vmatprep.subr.mxu0 0.0
        %357 = vmatpush1.msra.mxu0 0.0
        %358 = vmatprep.subr.mxu0 0.0
        %359 = vmatpush1.msra.mxu0 0.0
        %360 = vmatprep.subr.mxu0 0.0
        %361 = vmatpush1.msra.mxu0 0.0
        %362 = vmatprep.subr.mxu0 0.0
        %363 = vmatpush1.msra.mxu0 0.0
        %364 = vmatprep.subr.mxu0 0.0
        %365 = vmatpush1.msra.mxu0 0.0
        %366 = vmatprep.subr.mxu0 0.0
        %367 = vmatpush1.msra.mxu0 0.0
        %368 = vmatprep.subr.mxu0 0.0
        %369 = vmatpush1.msra.mxu0 0.0
        %370 = vmatprep.subr.mxu0 0.0
        %371 = vmatpush1.msra.mxu0 0.0
        %372 = vmatprep.subr.mxu0 0.0
        %373 = vmatpush1.msra.mxu0 0.0
        %374 = vmatprep.subr.mxu0 0.0
        %375 = vmatpush1.msra.mxu0 0.0
        %376 = vmatprep.subr.mxu0 0.0
        %377 = vmatpush1.msra.mxu0 0.0
        %378 = vmatprep.subr.mxu0 0.0
        %379 = vmatpush1.msra.mxu0 0.0
        %380 = vmatprep.subr.mxu0 0.0
        %381 = vmatpush1.msra.mxu0 0.0
        %382 = vmatprep.subr.mxu0 0.0
        %383 = vmatpush1.msra.mxu0 0.0
        %384 = vmatprep.subr.mxu0 0.0
        %385 = vmatpush1.msra.mxu0 0.0
        %386 = vmatprep.subr.mxu0 0.0
        %387 = vmatpush1.msra.mxu0 0.0
        %388 = vmatprep.subr.mxu0 0.0
        %389 = vmatpush1.msra.mxu0 0.0
        %390 = vmatprep.subr.mxu0 0.0
        %391 = vmatpush1.msra.mxu0 0.0
        %392 = vmatprep.subr.mxu0 0.0
        %393 = vmatpush1.msra.mxu0 0.0
        %394 = vmatprep.subr.mxu0 0.0
        %395 = vmatpush1.msra.mxu0 0.0
        %396 = vmatprep.subr.mxu0 0.0
        %397 = vmatpush1.msra.mxu0 0.0
        %398 = vmatprep.subr.mxu0 0.0
        %399 = vmatpush1.msra.mxu0 0.0
        %400 = vmatprep.subr.mxu0 0.0
        %401 = vmatpush1.msra.mxu0 0.0
        %402 = vmatprep.subr.mxu0 0.0
        %403 = vmatpush1.msra.mxu0 0.0
        %404 = vmatprep.subr.mxu0 0.0
        %405 = vmatpush1.msra.mxu0 0.0
        %406 = vmatprep.subr.mxu0 0.0
        %407 = vmatpush1.msra.mxu0 0.0
        %408 = vmatprep.subr.mxu0 0.0
        %409 = vmatpush1.msra.mxu0 0.0
        %410 = vmatprep.mubr.f32.mxu0 0.0
        %411 = vmatmul.mubr.f32.gmra.mrb[0].mxu0 %v340
        %v412 = vpop.f32.mrb[0].mxu0
        %v413 = vadd.f32 %v337, %v412
        %v414 = vpop.f32.mrb[0].mxu0
        %415 = vdwg.mxu0
        %v416 = vxor.u32 %v413, 2147483648
        %v417 = vmul.f32 %v416, 1.442695
        %v418 = vpow.pop %v417
        %v419 = vadd.f32 %v418, 1.0
        %v420 = vrcp.pop %v419
        %v421 = vmul.f32 1.0, %v420
        %v422 = vlaneseq
        %v423 = vshrl.u32 %v422, 7
        %v424 = vsub.s32 0, %v423
        %v425 = vrot.slane %v421, %v424
        %427 = vbcast.lane.b32.xlu0 %v425, 256
        %v428 = vpop.permute.xlu0 %427
        %v429 = vmul.f32 %v241, %v428
        %v430 = vmul.f32 %v242, %v428
        %431 = vst [vmem:[%s240] sm:$0xff] %v429
        %432 = vst [vmem:[%s240 + $0x8] sm:$0xff] %v430
        %s433 = sand.u32 %s140, 1
        %s434 = scalar_lea.sflag [#allocation4], %s433
        %s435 = sand.u32 %s140, 1
        %s436 = smul.addr %s435, 16
        %s437 = scalar_lea.vmem [#allocation5], %s436
        // Predicated region
        $region45: #{tpu_custom_call.1} parent=39 // pred_check
          %p438 = pneg %p150
        $region46: #{tpu_custom_call.1} parent=39 // pred_check_branch
          %440 = sbr.rel (%p438) target = $region48
        $region47: #{tpu_custom_call.1} parent=39 // pred_region
          %s442 = ssub.s32 256, 256
          %443 = vsyncadd %s434, %s442
          %s444 = smul.addr %s22, 2
          %s445 = smul.addr %s444, 128
          %s446 = scalar_lea.hbm %s5, %s445
          %s448 = sshll.u32 %s437, 4
          %s449 = int_to_ptr.vmem [resolvable:$true] %s448
          %451 = dma.vmem_to_hbm [thread:$0]  %s449, 256, %s446, %s434
        $region48: #{tpu_custom_call.1} parent=39 // pred_fallthru
          _
      $region40: #{tpu_custom_call.1} parent=5 // pred_fallthru
        _
      %p452 = scmp.le.s32.totalorder 2, %s17
      // Predicated region
      $region49: #{tpu_custom_call.1} parent=5 // pred_check
        %p453 = pneg %p452
      $region50: #{tpu_custom_call.1} parent=5 // pred_check_branch
        %455 = sbr.rel (%p453) target = $region52
      $region51: #{tpu_custom_call.1} parent=5 // pred_region
        %s456 = ssub.s32 %s17, 2
        // Predicated region
        $region53: #{tpu_custom_call.1} parent=51 // pred_check
          %p457 = pneg %p156
        $region54: #{tpu_custom_call.1} parent=51 // pred_check_branch
          %459 = sbr.rel (%p457) target = $region56
        $region55: #{tpu_custom_call.1} parent=51 // pred_region
          %s460 = sand.u32 %s141, 1
          %s461 = scalar_lea.sflag [#allocation4], %s460
          %s462 = sand.u32 %s141, 1
          %s463 = smul.addr %s462, 16
          %s464 = scalar_lea.vmem [#allocation5], %s463
          %465 = dma.done %s461, 256
        $region56: #{tpu_custom_call.1} parent=51 // pred_fallthru
          _
      $region52: #{tpu_custom_call.1} parent=5 // pred_fallthru
        _
    $region6: #{tpu_custom_call.1} parent=1 // loop_footer
      %s21 = sadd.s32 1, %s17
    $region7: #{tpu_custom_call.1} parent=1 // loop_footer_branch
      %16 = sbr.rel target = $region3
    $region8: #{tpu_custom_call.1} parent=1 // loop_exit
      _
    %466 = vsyncpa [#allocation3], 1
    %s467 = scalar_lea.sflag [#allocation3], 1
    %468 = vsyncpa %s467, 1
    %469 = vsyncpa [#allocation4], 1
    %s470 = scalar_lea.sflag [#allocation4], 1
    %471 = vsyncpa %s470, 1

</llo_original>
